<compile_context>
chip_gen: v7x
topology: tpu7x:2x2x1
jax: 0.10.0
libtpu: 0.0.40
codegen_flags: <defaults>
</compile_context>

<pallas_src>
import jax
import jax.numpy as jnp
from jax.experimental import pallas as pl
from jax.experimental.pallas import tpu as pltpu


# --------------------------------------------------------------------------------------
# Fused Pallas kernel: linear + k.q^T + diagonal-masked softmax + agent-mixing matmul.
# --------------------------------------------------------------------------------------
def _mimo_attn_kernel(qu_ref, k_ref, v_ref, w_ref, b_ref, out_ref, att_ref, att_sc):
    # qu_ref : (1, N, Q)    query messages of one batch element
    # k_ref  : (1, N, K)    keys of one batch element
    # v_ref  : (1, N, DT)   one feature tile of the flattened values (DT on the lane axis)
    # w_ref  : (Q, K)       Linear weight, already transposed to (in, out)
    # b_ref  : (1, K)       Linear bias
    # out_ref: (1, N, DT)   mixed features for this tile
    # att_ref: (1, N, N)    append_att (zero diagonal, columns sum to 1)
    # att_sc : (N, N)       VMEM scratch holding att for the current batch element
    n = qu_ref.shape[1]

    # Compute the (tiny) attention matrix once per batch element, on its first feature
    # tile; the scratch persists across the inner ("arbitrary") feature-tile axis.
    @pl.when(pl.program_id(1) == 0)
    def _():
        qu = qu_ref[0]                           # (N, Q)
        w = w_ref[...]                           # (Q, K)
        bias = b_ref[...]                        # (1, K)
        query = jnp.dot(qu, w, preferred_element_type=jnp.float32) + bias   # (N, K)

        keys = k_ref[0]                          # (N, K)
        # attn[i, j] = <k_i, query_j>   (keys on sublanes, queries on lanes)
        attn = jax.lax.dot_general(
            keys, query, (((1,), (1,)), ((), ())),
            preferred_element_type=jnp.float32)  # (Nk, Nq)

        # Masked softmax over the key axis (axis 0), excluding the self entry k == q.
        # Identical to the PyTorch triu[:-1]+tril[1:] "delete diagonal" -> softmax ->
        # "re-append zero diagonal" sequence.
        rows = jax.lax.broadcasted_iota(jnp.int32, (n, n), 0)
        cols = jax.lax.broadcasted_iota(jnp.int32, (n, n), 1)
        masked = jnp.where(rows == cols, -jnp.inf, attn)
        m = jnp.max(masked, axis=0, keepdims=True)
        e = jnp.exp(masked - m)                  # diagonal -> exp(-inf) == 0 exactly
        s = jnp.sum(e, axis=0, keepdims=True)
        att_sc[...] = e / s                      # (Nk, Nq), zero diag, cols sum to 1

    att = att_sc[...]                            # (Nk, Nq)
    vv = v_ref[0]                                # (N, DT)
    # out[q, d] = sum_k att[k, q] * v[k, d]
    out = jax.lax.dot_general(
        att, vv, (((0,), (0,)), ((), ())),
        preferred_element_type=jnp.float32)      # (Nq, DT)

    out_ref[0] = out.astype(out_ref.dtype)
    att_ref[0] = att.astype(att_ref.dtype)       # same block across the tile axis;
                                                 # written back to HBM once per batch


def _pick_feature_tile(d, n, budget_bytes=8 << 20):
    """Largest lane-dense (multiple-of-128) divisor of D whose double-buffered
    v-in + out tiles fit a conservative VMEM budget; whole D if it already fits
    (or has no lane-dense divisor, full-extent blocks are always legal)."""
    per_dt_bytes = 4 * n * 4          # (v tile + out tile) x double-buffer x f32
    cap = max(128, budget_bytes // per_dt_bytes)
    if d <= cap or d % 128 != 0:
        return d
    best = d
    t = 128
    while t <= cap:
        if d % t == 0:
            best = t
        t += 128
    return best


def mimo_who_attention(qu, k, v, weight, bias):
    """qu: (B, N, Q); k: (B, N, K); v: (B, N, C, H, W);
    weight: (K, Q) (PyTorch nn.Linear layout); bias: (K,).
    Returns (output_sum (B, N, C, H, W), append_att (B, N, N))."""
    B, Nq, Q = qu.shape
    _, Nk, K = k.shape
    assert Nq == Nk, "key_num must equal query_num (square agent attention)"
    N = Nq
    C, H, W = v.shape[2], v.shape[3], v.shape[4]
    D = C * H * W

    v_flat = v.reshape(B, N, D)
    w_lin = jnp.transpose(weight)            # (Q, K)
    b_lin = bias.reshape(1, K)

    DT = _pick_feature_tile(D, N)
    n_dt = D // DT

    out_flat, att = pl.pallas_call(
        _mimo_attn_kernel,
        out_shape=(
            jax.ShapeDtypeStruct((B, N, D), jnp.float32),
            jax.ShapeDtypeStruct((B, N, N), jnp.float32),
        ),
        grid=(B, n_dt),
        in_specs=[
            pl.BlockSpec((1, N, Q), lambda b, d: (b, 0, 0)),    # qu
            pl.BlockSpec((1, N, K), lambda b, d: (b, 0, 0)),    # k
            pl.BlockSpec((1, N, DT), lambda b, d: (b, 0, d)),   # v (feature tile)
            pl.BlockSpec((Q, K), lambda b, d: (0, 0)),          # linear weight
            pl.BlockSpec((1, K), lambda b, d: (0, 0)),          # linear bias
        ],
        out_specs=(
            pl.BlockSpec((1, N, DT), lambda b, d: (b, 0, d)),   # mixed features
            pl.BlockSpec((1, N, N), lambda b, d: (b, 0, 0)),    # append_att
        ),
        scratch_shapes=[pltpu.VMEM((N, N), jnp.float32)],
        compiler_params=pltpu.CompilerParams(
            dimension_semantics=("parallel", "arbitrary"),
        ),
    )(qu, k, v_flat, w_lin, b_lin)

    return out_flat.reshape(B, N, C, H, W), att


# --------------------------------------------------------------------------------------
# Pure-JAX reference that follows the PyTorch code line by line (for validation).
# --------------------------------------------------------------------------------------
def reference_forward(qu, k, v, weight, bias):
    B, N, _ = qu.shape
    query = jnp.einsum("bnq,kq->bnk", qu, weight) + bias          # (B, N, K)
    attn = jnp.einsum("bnk,bmk->bnm", k, query)                   # (B, Nk, Nq)

    up = jnp.triu(attn, k=1)[:, :-1, :]
    dow = jnp.tril(attn, k=-1)[:, 1:, :]
    del_diag = up + dow                                           # (B, N-1, N)
    sm = jax.nn.softmax(del_diag, axis=1)

    up2 = jnp.triu(sm, k=1)
    up_ext = jnp.concatenate([up2, jnp.zeros((B, 1, N), sm.dtype)], axis=1)
    dow2 = jnp.tril(sm, k=0)
    dow_ext = jnp.concatenate([jnp.zeros((B, 1, N), sm.dtype), dow2], axis=1)
    append = up_ext + dow_ext                                     # (B, N, N)

    out = jnp.einsum("bkq,bkchw->bqchw", append, v)
    return out, append


if __name__ == "__main__":
    key = jax.random.PRNGKey(0)
    k1, k2, k3, k4, k5 = jax.random.split(key, 5)

    # Small shapes: batch=2, N=8 agents, query/key hidden 32, value maps 4x16x16.
    B, N = 2, 8
    query_size, key_size = 32, 32
    C, H, W = 4, 16, 16

    qu = 0.3 * jax.random.normal(k1, (B, N, query_size), jnp.float32)
    keys = 0.3 * jax.random.normal(k2, (B, N, key_size), jnp.float32)
    vals = jax.random.normal(k3, (B, N, C, H, W), jnp.float32)
    weight = (1.0 / (query_size ** 0.5)) * jax.random.normal(
        k4, (key_size, query_size), jnp.float32)                  # PyTorch Linear layout
    bias = 0.1 * jax.random.normal(k5, (key_size,), jnp.float32)

    fwd = jax.jit(mimo_who_attention)
    out, att = fwd(qu, keys, vals, weight, bias)
    out = jax.block_until_ready(out)
    att = jax.block_until_ready(att)

    assert out.shape == (B, N, C, H, W), out.shape
    assert att.shape == (B, N, N), att.shape
    assert out.dtype == jnp.float32 and att.dtype == jnp.float32
    assert bool(jnp.all(jnp.isfinite(out)))
    # Structural checks: exactly-zero self-attention, columns (keys) sum to 1.
    diag = jnp.diagonal(att, axis1=1, axis2=2)
    assert bool(jnp.max(jnp.abs(diag)) < 1e-6)
    assert bool(jnp.allclose(jnp.sum(att, axis=1), 1.0, atol=1e-3))

    # Numerical check against a line-by-line reference of the PyTorch forward.
    ref_out, ref_att = reference_forward(qu, keys, vals, weight, bias)
    assert bool(jnp.allclose(att, ref_att, atol=3e-2, rtol=3e-2))
    assert bool(jnp.allclose(out, ref_out, atol=3e-2, rtol=3e-2))

    print("KERNEL_OK")
</pallas_src>

<mosaic_0001>
module attributes {stable_mosaic.version = 11 : i64} {
  func.func @_mimo_attn_kernel(%arg0: i32, %arg1: i32, %arg2: memref<1x8x32xf32, #tpu.memory_space<vmem>>, %arg3: memref<1x8x32xf32, #tpu.memory_space<vmem>>, %arg4: memref<1x8x1024xf32, #tpu.memory_space<vmem>>, %arg5: memref<32x32xf32, #tpu.memory_space<vmem>>, %arg6: memref<1x32xf32, #tpu.memory_space<vmem>>, %arg7: memref<1x8x1024xf32, #tpu.memory_space<vmem>>, %arg8: memref<1x8x8xf32, #tpu.memory_space<vmem>>, %arg9: memref<8x8xf32, #tpu.memory_space<vmem>>) attributes {dimension_semantics = [#tpu.dimension_semantics<parallel>, #tpu.dimension_semantics<arbitrary>], iteration_bounds = array<i64: 2, 1>, scalar_prefetch = 0 : i64, scratch_operands = 1 : i64, tpu.core_type = #tpu.core_type<tc>, window_params = [{transform_indices = @transform_0, window_bounds = array<i64: 1, 8, 32>}, {transform_indices = @transform_1, window_bounds = array<i64: 1, 8, 32>}, {transform_indices = @transform_2, window_bounds = array<i64: 1, 8, 1024>}, {pipeline_mode = #tpu.pipeline_mode<synchronous>, transform_indices = @transform_3, window_bounds = array<i64: 32, 32>}, {pipeline_mode = #tpu.pipeline_mode<synchronous>, transform_indices = @transform_4, window_bounds = array<i64: 1, 32>}, {transform_indices = @transform_5, window_bounds = array<i64: 1, 8, 1024>}, {transform_indices = @transform_6, window_bounds = array<i64: 1, 8, 8>}]} {
    %c0_i32 = arith.constant 0 : i32
    %0 = arith.cmpi eq, %arg1, %c0_i32 : i32
    %1 = arith.extui %0 : i1 to i32
    %c0_i32_0 = arith.constant 0 : i32
    %2 = arith.cmpi ne, %1, %c0_i32_0 : i32
    scf.if %2 {
      %c0_11 = arith.constant 0 : index
      %c0_12 = arith.constant 0 : index
      %c0_13 = arith.constant 0 : index
      %13 = vector.load %arg2[%c0_11, %c0_12, %c0_13] : memref<1x8x32xf32, #tpu.memory_space<vmem>>, vector<1x8x32xf32>
      %14 = vector.shape_cast %13 : vector<1x8x32xf32> to vector<8x32xf32>
      %c0_14 = arith.constant 0 : index
      %c0_15 = arith.constant 0 : index
      %15 = vector.load %arg5[%c0_14, %c0_15] : memref<32x32xf32, #tpu.memory_space<vmem>>, vector<32x32xf32>
      %c0_16 = arith.constant 0 : index
      %c0_17 = arith.constant 0 : index
      %16 = vector.load %arg6[%c0_16, %c0_17] : memref<1x32xf32, #tpu.memory_space<vmem>>, vector<1x32xf32>
      %cst_18 = arith.constant dense<0.000000e+00> : vector<8x32xf32>
      %17 = tpu.matmul %14, %15, %cst_18 {dimension_numbers = #tpu.dot_dimension_numbers<[1], [0], [0], [1], [0, 0, 1, 1], [], []>} : vector<8x32xf32>, vector<32x32xf32>, vector<8x32xf32> -> vector<8x32xf32>
      %18 = vector.broadcast %16 : vector<1x32xf32> to vector<8x32xf32>
      %19 = arith.addf %17, %18 : vector<8x32xf32>
      %c0_19 = arith.constant 0 : index
      %c0_20 = arith.constant 0 : index
      %c0_21 = arith.constant 0 : index
      %20 = vector.load %arg3[%c0_19, %c0_20, %c0_21] : memref<1x8x32xf32, #tpu.memory_space<vmem>>, vector<1x8x32xf32>
      %21 = vector.shape_cast %20 : vector<1x8x32xf32> to vector<8x32xf32>
      %cst_22 = arith.constant dense<0.000000e+00> : vector<8x8xf32>
      %22 = tpu.matmul %21, %19, %cst_22 {dimension_numbers = #tpu.dot_dimension_numbers<[1], [1], [0], [0], [0, 0, 1, 0], [], []>} : vector<8x32xf32>, vector<8x32xf32>, vector<8x8xf32> -> vector<8x8xf32>
      %23 = tpu.iota {dimensions = array<i32: 0>} : vector<8x8xi32>
      %24 = tpu.iota {dimensions = array<i32: 1>} : vector<8x8xi32>
      %25 = arith.cmpi eq, %23, %24 : vector<8x8xi32>
      %cst_23 = arith.constant 0xFF800000 : f32
      %26 = vector.broadcast %cst_23 : f32 to vector<8x8xf32>
      %27 = arith.select %25, %26, %22 : vector<8x8xi1>, vector<8x8xf32>
      %cst_24 = arith.constant dense<0xFF800000> : vector<8xf32>
      %28 = vector.multi_reduction <maximumf>, %27, %cst_24 [0] : vector<8x8xf32> to vector<8xf32>
      %29 = vector.shape_cast %28 : vector<8xf32> to vector<1x8xf32>
      %30 = vector.broadcast %29 : vector<1x8xf32> to vector<8x8xf32>
      %31 = arith.subf %27, %30 : vector<8x8xf32>
      %32 = math.exp %31 : vector<8x8xf32>
      %cst_25 = arith.constant dense<0.000000e+00> : vector<8xf32>
      %33 = vector.multi_reduction <add>, %32, %cst_25 [0] : vector<8x8xf32> to vector<8xf32>
      %34 = vector.shape_cast %33 : vector<8xf32> to vector<1x8xf32>
      %35 = vector.broadcast %34 : vector<1x8xf32> to vector<8x8xf32>
      %36 = arith.divf %32, %35 : vector<8x8xf32>
      %c0_26 = arith.constant 0 : index
      %c0_27 = arith.constant 0 : index
      %37 = vector.load %arg9[%c0_26, %c0_27] : memref<8x8xf32, #tpu.memory_space<vmem>>, vector<8x8xf32>
      tpu.vector_store %arg9[%c0_26, %c0_27], %36 {strides = array<i32>} : memref<8x8xf32, #tpu.memory_space<vmem>>, vector<8x8xf32>,
    } else {
    }
    %c0 = arith.constant 0 : index
    %c0_1 = arith.constant 0 : index
    %3 = vector.load %arg9[%c0, %c0_1] : memref<8x8xf32, #tpu.memory_space<vmem>>, vector<8x8xf32>
    %c0_2 = arith.constant 0 : index
    %c0_3 = arith.constant 0 : index
    %c0_4 = arith.constant 0 : index
    %4 = vector.load %arg4[%c0_2, %c0_3, %c0_4] : memref<1x8x1024xf32, #tpu.memory_space<vmem>>, vector<1x8x1024xf32>
    %5 = vector.shape_cast %4 : vector<1x8x1024xf32> to vector<8x1024xf32>
    %cst = arith.constant dense<0.000000e+00> : vector<8x1024xf32>
    %6 = tpu.matmul %3, %5, %cst {dimension_numbers = #tpu.dot_dimension_numbers<[0], [0], [1], [1], [0, 1, 1, 1], [], []>} : vector<8x8xf32>, vector<8x1024xf32>, vector<8x1024xf32> -> vector<8x1024xf32>
    %c0_5 = arith.constant 0 : index
    %c0_6 = arith.constant 0 : index
    %c0_7 = arith.constant 0 : index
    %7 = vector.load %arg7[%c0_5, %c0_6, %c0_7] : memref<1x8x1024xf32, #tpu.memory_space<vmem>>, vector<1x8x1024xf32>
    %8 = vector.shape_cast %7 : vector<1x8x1024xf32> to vector<8x1024xf32>
    %9 = vector.shape_cast %6 : vector<8x1024xf32> to vector<1x8x1024xf32>
    tpu.vector_store %arg7[%c0_5, %c0_6, %c0_7], %9 {strides = array<i32>} : memref<1x8x1024xf32, #tpu.memory_space<vmem>>, vector<1x8x1024xf32>,
    %c0_8 = arith.constant 0 : index
    %c0_9 = arith.constant 0 : index
    %c0_10 = arith.constant 0 : index
    %10 = vector.load %arg8[%c0_8, %c0_9, %c0_10] : memref<1x8x8xf32, #tpu.memory_space<vmem>>, vector<1x8x8xf32>
    %11 = vector.shape_cast %10 : vector<1x8x8xf32> to vector<8x8xf32>
    %12 = vector.shape_cast %3 : vector<8x8xf32> to vector<1x8x8xf32>
    tpu.vector_store %arg8[%c0_8, %c0_9, %c0_10], %12 {strides = array<i32>} : memref<1x8x8xf32, #tpu.memory_space<vmem>>, vector<1x8x8xf32>,
    return
  }
  func.func @transform_0(%arg0: i32, %arg1: i32) -> (i32, i32, i32) {
    %c0_i32 = arith.constant 0 : i32
    %c0_i32_0 = arith.constant 0 : i32
    %c0_i32_1 = arith.constant 0 : i32
    return %arg0, %c0_i32, %c0_i32_0 : i32, i32, i32
  }
  func.func @transform_1(%arg0: i32, %arg1: i32) -> (i32, i32, i32) {
    %c0_i32 = arith.constant 0 : i32
    %c0_i32_0 = arith.constant 0 : i32
    %c0_i32_1 = arith.constant 0 : i32
    return %arg0, %c0_i32, %c0_i32_0 : i32, i32, i32
  }
  func.func @transform_2(%arg0: i32, %arg1: i32) -> (i32, i32, i32) {
    %c0_i32 = arith.constant 0 : i32
    %c0_i32_0 = arith.constant 0 : i32
    return %arg0, %c0_i32, %arg1 : i32, i32, i32
  }
  func.func @transform_3(%arg0: i32, %arg1: i32) -> (i32, i32) {
    %c0_i32 = arith.constant 0 : i32
    %c0_i32_0 = arith.constant 0 : i32
    %c0_i32_1 = arith.constant 0 : i32
    return %c0_i32, %c0_i32_0 : i32, i32
  }
  func.func @transform_4(%arg0: i32, %arg1: i32) -> (i32, i32) {
    %c0_i32 = arith.constant 0 : i32
    %c0_i32_0 = arith.constant 0 : i32
    %c0_i32_1 = arith.constant 0 : i32
    return %c0_i32, %c0_i32_0 : i32, i32
  }
  func.func @transform_5(%arg0: i32, %arg1: i32) -> (i32, i32, i32) {
    %c0_i32 = arith.constant 0 : i32
    %c0_i32_0 = arith.constant 0 : i32
    return %arg0, %c0_i32, %arg1 : i32, i32, i32
  }
  func.func @transform_6(%arg0: i32, %arg1: i32) -> (i32, i32, i32) {
    %c0_i32 = arith.constant 0 : i32
    %c0_i32_0 = arith.constant 0 : i32
    %c0_i32_1 = arith.constant 0 : i32
    return %arg0, %c0_i32, %c0_i32_0 : i32, i32, i32
  }
}

</mosaic_0001>

<llo_original>
// kernel: mimo_who_attention.1
$region0: #{mimo_who_attention.1}
  #allocation0 [shape = 'u32[]', space=smem, size = 0x4, offset = 0x4, fixed_abs, tag = 'smem constant byte address 0x4 - core index']
  #allocation1 [shape = 'u32[144,128]{1,0:T(1,128)}', space=vmem, size = 0x12000, scoped, tag = 'internal scratch']
  #allocation2 [shape = 'f32[8,8]{1,0:T(8,128)}', space=vmem, size = 0x1000, scoped, tag = 'scratch operand']
  %s0 = inlined_call_operand.vmem [shape: f32[2,8,32], index: 0, kind: input, shape index: {}]
  %s1 = inlined_call_operand.vmem [shape: f32[2,8,32], index: 1, kind: input, shape index: {}]
  %s2 = inlined_call_operand.vmem [shape: f32[2,8,1024], index: 2, kind: input, shape index: {}]
  %s3 = inlined_call_operand.vmem [shape: f32[32,32], index: 3, kind: input, shape index: {}]
  %s4 = inlined_call_operand.vmem [shape: f32[1,32], index: 4, kind: input, shape index: {}]
  %s5 = inlined_call_operand.vmem [shape: f32[2,8,1024], index: 5, kind: output, shape index: {0}]
  %s6 = inlined_call_operand.hbm [shape: f32[2,8,8], index: 6, kind: output, shape index: {1}]
  %7 = xla_tuple %s5, %s6
  %s8 = sld [smem:[#allocation0]]
  $region65: #{mimo_who_attention.1} parent=0
    _
  %s10 = ssub.s32 1, %s8
  %s11 = scalar_select 0, %s10, %s8
  $region1: #{mimo_who_attention.1} parent=0
    #allocation3 [shape = 'u8[8192]{0}', space=vmem, size = 0x2000, scoped, tag = 'output window, operand 1']
    #allocation4 [shape = 's32[2]{0}', space=sflag, size = 0x8, scoped, tag = 'scoped memory for mimo_who_attention.1']
    %12 = vsyncpa [#allocation4], 0
    %s13 = scalar_lea.sflag [#allocation4], 1
    %14 = vsyncpa %s13, 0
    loop: start=0, step=1, limit=4
    $region2: #{mimo_who_attention.1} parent=1 // loop_pre_header
      _
    $region3: #{mimo_who_attention.1} parent=1 // loop_header
      %s16 = sphi 0, %s20
      %p17 = scmp.ge.s32.totalorder %s16, 4
      %s23 = sphi 0, %s35
      %s24 = sphi 0, %s31
      %s25 = sphi 0, %s23
      %s26 = sphi 0, %s24
      %s27 = sphi 0, %s25
      %s28 = sphi 0, %s26
      %s38 = sphi 0, %s40
      %s41 = sphi 0, %s38
      %s42 = sphi 0, %s41
      %s58 = sphi 0, %s42
      %s64 = sphi 0, %s66
      %s67 = sphi 0, %s64
      %s68 = sphi 0, %s67
      %s84 = sphi 0, %s68
      %s92 = sphi 0, %s94
      %s95 = sphi 0, %s92
      %s96 = sphi 0, %s95
      %s112 = sphi 0, %s96
      %s116 = sphi 0, %s116
      %s118 = sphi 0, %s116
      %s119 = sphi 0, %s118
      %s133 = sphi 0, %s119
      %s137 = sphi 0, %s137
      %s139 = sphi 0, %s137
      %s140 = sphi 0, %s139
      %s154 = sphi 0, %s140
      %s162 = sphi 0, %s164
      %s165 = sphi 0, %s162
      %s166 = sphi 0, %s165
      %s182 = sphi 0, %s166
      %s188 = sphi 0, %s190
      %s191 = sphi 0, %s188
      %s192 = sphi 0, %s191
      %s208 = sphi 0, %s192
    $region4: #{mimo_who_attention.1} parent=1 // loop_header_branch
      %19 = sbr.rel (%p17) target = $region8
    $region5: #{mimo_who_attention.1} parent=1 // loop_body
      %s21 = ssub.s32 %s16, 1
      %s22 = ssub.s32 %s16, 2
      %s29 = sadd.s32 1, %s24
      %p30 = scmp.ge.s32.totalorder %s29, 1
      %s31 = scalar_select %p30, 0, %s29
      %s32 = sadd.s32 1, %s23
      %s33 = scalar_select %p30, %s32, %s23
      %p34 = scmp.ge.s32.totalorder %s33, 2
      %s35 = scalar_select %p34, 0, %s33
      %s36 = ssub.s32 %s23, %s35
      %p37 = scmp.eq.s32.totalorder %s36, 0
      %s39 = sadd.s32 %s38, 1
      %s40 = scalar_select %p37, %s38, %s39
      %p43 = pneg %p37
      %p44 = scmp.eq.s32.totalorder %s16, 1
      %p45 = por %p43, %p44
      %p46 = scmp.ne.s32.totalorder %s38, %s41
      %p47 = scmp.eq.s32.totalorder %s16, 0
      %p48 = por %p46, %p47
      %p49 = scmp.ne.s32.totalorder %s38, %s41
      %p50 = scmp.eq.s32.totalorder %s21, 1
      %p51 = por %p49, %p50
      %p52 = scmp.ne.s32.totalorder %s41, %s42
      %p53 = scmp.eq.s32.totalorder %s21, 0
      %p54 = por %p52, %p53
      %p55 = scmp.ne.s32.totalorder %s41, %s42
      %p56 = scmp.eq.s32.totalorder %s22, 1
      %p57 = por %p55, %p56
      %p59 = scmp.ne.s32.totalorder %s42, %s58
      %p60 = scmp.eq.s32.totalorder %s22, 0
      %p61 = por %p59, %p60
      %s62 = ssub.s32 %s23, %s35
      %p63 = scmp.eq.s32.totalorder %s62, 0
      %s65 = sadd.s32 %s64, 1
      %s66 = scalar_select %p63, %s64, %s65
      %p69 = pneg %p63
      %p70 = scmp.eq.s32.totalorder %s16, 1
      %p71 = por %p69, %p70
      %p72 = scmp.ne.s32.totalorder %s64, %s67
      %p73 = scmp.eq.s32.totalorder %s16, 0
      %p74 = por %p72, %p73
      %p75 = scmp.ne.s32.totalorder %s64, %s67
      %p76 = scmp.eq.s32.totalorder %s21, 1
      %p77 = por %p75, %p76
      %p78 = scmp.ne.s32.totalorder %s67, %s68
      %p79 = scmp.eq.s32.totalorder %s21, 0
      %p80 = por %p78, %p79
      %p81 = scmp.ne.s32.totalorder %s67, %s68
      %p82 = scmp.eq.s32.totalorder %s22, 1
      %p83 = por %p81, %p82
      %p85 = scmp.ne.s32.totalorder %s68, %s84
      %p86 = scmp.eq.s32.totalorder %s22, 0
      %p87 = por %p85, %p86
      %s88 = ssub.s32 %s23, %s35
      %s89 = ssub.s32 %s24, %s31
      %s90 = sor.u32 %s88, %s89
      %p91 = scmp.eq.s32.totalorder %s90, 0
      %s93 = sadd.s32 %s92, 1
      %s94 = scalar_select %p91, %s92, %s93
      %p97 = pneg %p91
      %p98 = scmp.eq.s32.totalorder %s16, 1
      %p99 = por %p97, %p98
      %p100 = scmp.ne.s32.totalorder %s92, %s95
      %p101 = scmp.eq.s32.totalorder %s16, 0
      %p102 = por %p100, %p101
      %p103 = scmp.ne.s32.totalorder %s92, %s95
      %p104 = scmp.eq.s32.totalorder %s21, 1
      %p105 = por %p103, %p104
      %p106 = scmp.ne.s32.totalorder %s95, %s96
      %p107 = scmp.eq.s32.totalorder %s21, 0
      %p108 = por %p106, %p107
      %p109 = scmp.ne.s32.totalorder %s95, %s96
      %p110 = scmp.eq.s32.totalorder %s22, 1
      %p111 = por %p109, %p110
      %p113 = scmp.ne.s32.totalorder %s96, %s112
      %p114 = scmp.eq.s32.totalorder %s22, 0
      %p115 = por %p113, %p114
      %s117 = sadd.s32 %s116, 1
      %p120 = scmp.eq.s32.totalorder %s16, 1
      %p121 = scmp.ne.s32.totalorder %s116, %s118
      %p122 = scmp.eq.s32.totalorder %s16, 0
      %p123 = por %p121, %p122
      %p124 = scmp.ne.s32.totalorder %s116, %s118
      %p125 = scmp.eq.s32.totalorder %s21, 1
      %p126 = por %p124, %p125
      %p127 = scmp.ne.s32.totalorder %s118, %s119
      %p128 = scmp.eq.s32.totalorder %s21, 0
      %p129 = por %p127, %p128
      %p130 = scmp.ne.s32.totalorder %s118, %s119
      %p131 = scmp.eq.s32.totalorder %s22, 1
      %p132 = por %p130, %p131
      %p134 = scmp.ne.s32.totalorder %s119, %s133
      %p135 = scmp.eq.s32.totalorder %s22, 0
      %p136 = por %p134, %p135
      %s138 = sadd.s32 %s137, 1
      %p141 = scmp.eq.s32.totalorder %s16, 1
      %p142 = scmp.ne.s32.totalorder %s137, %s139
      %p143 = scmp.eq.s32.totalorder %s16, 0
      %p144 = por %p142, %p143
      %p145 = scmp.ne.s32.totalorder %s137, %s139
      %p146 = scmp.eq.s32.totalorder %s21, 1
      %p147 = por %p145, %p146
      %p148 = scmp.ne.s32.totalorder %s139, %s140
      %p149 = scmp.eq.s32.totalorder %s21, 0
      %p150 = por %p148, %p149
      %p151 = scmp.ne.s32.totalorder %s139, %s140
      %p152 = scmp.eq.s32.totalorder %s22, 1
      %p153 = por %p151, %p152
      %p155 = scmp.ne.s32.totalorder %s140, %s154
      %p156 = scmp.eq.s32.totalorder %s22, 0
      %p157 = por %p155, %p156
      %s158 = ssub.s32 %s23, %s35
      %s159 = ssub.s32 %s24, %s31
      %s160 = sor.u32 %s158, %s159
      %p161 = scmp.eq.s32.totalorder %s160, 0
      %s163 = sadd.s32 %s162, 1
      %s164 = scalar_select %p161, %s162, %s163
      %p167 = pneg %p161
      %p168 = scmp.eq.s32.totalorder %s16, 1
      %p169 = por %p167, %p168
      %p170 = scmp.ne.s32.totalorder %s162, %s165
      %p171 = scmp.eq.s32.totalorder %s16, 0
      %p172 = por %p170, %p171
      %p173 = scmp.ne.s32.totalorder %s162, %s165
      %p174 = scmp.eq.s32.totalorder %s21, 1
      %p175 = por %p173, %p174
      %p176 = scmp.ne.s32.totalorder %s165, %s166
      %p177 = scmp.eq.s32.totalorder %s21, 0
      %p178 = por %p176, %p177
      %p179 = scmp.ne.s32.totalorder %s165, %s166
      %p180 = scmp.eq.s32.totalorder %s22, 1
      %p181 = por %p179, %p180
      %p183 = scmp.ne.s32.totalorder %s166, %s182
      %p184 = scmp.eq.s32.totalorder %s22, 0
      %p185 = por %p183, %p184
      %s186 = ssub.s32 %s23, %s35
      %p187 = scmp.eq.s32.totalorder %s186, 0
      %s189 = sadd.s32 %s188, 1
      %s190 = scalar_select %p187, %s188, %s189
      %p193 = pneg %p187
      %p194 = scmp.eq.s32.totalorder %s16, 1
      %p195 = por %p193, %p194
      %p196 = scmp.ne.s32.totalorder %s188, %s191
      %p197 = scmp.eq.s32.totalorder %s16, 0
      %p198 = por %p196, %p197
      %p199 = scmp.ne.s32.totalorder %s188, %s191
      %p200 = scmp.eq.s32.totalorder %s21, 1
      %p201 = por %p199, %p200
      %p202 = scmp.ne.s32.totalorder %s191, %s192
      %p203 = scmp.eq.s32.totalorder %s21, 0
      %p204 = por %p202, %p203
      %p205 = scmp.ne.s32.totalorder %s191, %s192
      %p206 = scmp.eq.s32.totalorder %s22, 1
      %p207 = por %p205, %p206
      %p209 = scmp.ne.s32.totalorder %s192, %s208
      %p210 = scmp.eq.s32.totalorder %s22, 0
      %p211 = por %p209, %p210
      %p212 = scmp.le.s32.totalorder 1, %s16
      %p213 = scmp.lt.s32.totalorder %s16, 3
      %p214 = pnand %p212, %p213
      %p215 = pneg %p214
      // Predicated region
      $region9: #{mimo_who_attention.1} parent=5 // pred_check
        _
      $region10: #{mimo_who_attention.1} parent=5 // pred_check_branch
        %217 = sbr.rel (%p214) target = $region12
      $region11: #{mimo_who_attention.1} parent=5 // pred_region
        %s218 = ssub.s32 %s16, 1
        // Predicated region
        $region13: #{mimo_who_attention.1} parent=11 // pred_check
          %p219 = pneg %p129
        $region14: #{mimo_who_attention.1} parent=11 // pred_check_branch
          %221 = sbr.rel (%p219) target = $region16
        $region15: #{mimo_who_attention.1} parent=11 // pred_region
          _
        $region16: #{mimo_who_attention.1} parent=11 // pred_fallthru
          _
        // Predicated region
        $region17: #{mimo_who_attention.1} parent=11 // pred_check
          %p222 = pneg %p150
        $region18: #{mimo_who_attention.1} parent=11 // pred_check_branch
          %224 = sbr.rel (%p222) target = $region20
        $region19: #{mimo_who_attention.1} parent=11 // pred_region
          _
        $region20: #{mimo_who_attention.1} parent=11 // pred_fallthru
          _
      $region12: #{mimo_who_attention.1} parent=5 // pred_fallthru
        _
      %p225 = scmp.lt.s32.totalorder %s16, 2
      // Predicated region
      $region21: #{mimo_who_attention.1} parent=5 // pred_check
        %p226 = pneg %p225
      $region22: #{mimo_who_attention.1} parent=5 // pred_check_branch
        %228 = sbr.rel (%p226) target = $region24
      $region23: #{mimo_who_attention.1} parent=5 // pred_region
        // Predicated region
        $region25: #{mimo_who_attention.1} parent=23 // pred_check
          %p229 = pneg %p48
        $region26: #{mimo_who_attention.1} parent=23 // pred_check_branch
          %231 = sbr.rel (%p229) target = $region28
        $region27: #{mimo_who_attention.1} parent=23 // pred_region
          %p232 = scmp.lt.s32.totalorder %s23, 1
          %s233 = scalar_select %p232, %s23, 1
          %s234 = smul.addr %s233, 8
          %s235 = scalar_lea.vmem %s0, %s234
        $region28: #{mimo_who_attention.1} parent=23 // pred_fallthru
          _
        // Predicated region
        $region29: #{mimo_who_attention.1} parent=23 // pred_check
          %p236 = pneg %p74
        $region30: #{mimo_who_attention.1} parent=23 // pred_check_branch
          %238 = sbr.rel (%p236) target = $region32
        $region31: #{mimo_who_attention.1} parent=23 // pred_region
          %p239 = scmp.lt.s32.totalorder %s23, 1
          %s240 = scalar_select %p239, %s23, 1
          %s241 = smul.addr %s240, 8
          %s242 = scalar_lea.vmem %s1, %s241
        $region32: #{mimo_who_attention.1} parent=23 // pred_fallthru
          _
        // Predicated region
        $region33: #{mimo_who_attention.1} parent=23 // pred_check
          %p243 = pneg %p102
        $region34: #{mimo_who_attention.1} parent=23 // pred_check_branch
          %245 = sbr.rel (%p243) target = $region36
        $region35: #{mimo_who_attention.1} parent=23 // pred_region
          %s246 = smul.u32 8, %s24
          %p247 = scmp.lt.s32.totalorder %s23, 1
          %s248 = scalar_select %p247, %s23, 1
          %p249 = scmp.lt.s32.totalorder %s246, 7
          %s250 = scalar_select %p249, %s246, 7
          %s251 = smul.addr %s248, 8
          %s252 = sadd.s32 %s250, %s251
          %s253 = smul.addr %s252, 8
          %s254 = scalar_lea.vmem %s2, %s253
          %s255 = smul.u32 8, %s24
        $region36: #{mimo_who_attention.1} parent=23 // pred_fallthru
          _
      $region24: #{mimo_who_attention.1} parent=5 // pred_fallthru
        _
      %p256 = scmp.le.s32.totalorder 1, %s16
      %p257 = scmp.lt.s32.totalorder %s16, 3
      %p258 = pnand %p256, %p257
      %p259 = pneg %p258
      // Predicated region
      $region37: #{mimo_who_attention.1} parent=5 // pred_check
        _
      $region38: #{mimo_who_attention.1} parent=5 // pred_check_branch
        %261 = sbr.rel (%p258) target = $region40
      $region39: #{mimo_who_attention.1} parent=5 // pred_region
        %s262 = ssub.s32 %s16, 1
        %p263 = scmp.lt.s32.totalorder %s25, 1
        %s264 = scalar_select %p263, %s25, 1
        %s265 = smul.addr %s264, 8
        %s266 = scalar_lea.vmem %s0, %s265
        %p267 = pneg %p54
        %p268 = pneg %p51
        %p269 = scmp.lt.s32.totalorder %s25, 1
        %s270 = scalar_select %p269, %s25, 1
        %s271 = smul.addr %s270, 8
        %s272 = scalar_lea.vmem %s1, %s271
        %p273 = pneg %p80
        %p274 = pneg %p77
        %s275 = smul.u32 8, %s26
        %p276 = scmp.lt.s32.totalorder %s25, 1
        %s277 = scalar_select %p276, %s25, 1
        %p278 = scmp.lt.s32.totalorder %s275, 7
        %s279 = scalar_select %p278, %s275, 7
        %s280 = smul.addr %s277, 8
        %s281 = sadd.s32 %s279, %s280
        %s282 = smul.addr %s281, 8
        %s283 = scalar_lea.vmem %s2, %s282
        %p284 = pneg %p108
        %p285 = pneg %p105
        %p286 = pneg %p129
        %p287 = pneg %p126
        %p288 = pneg %p150
        %p289 = pneg %p147
        %p290 = pneg %p178
        %p291 = pneg %p175
        %s292 = smul.u32 8, %s26
        %p293 = scmp.lt.s32.totalorder %s25, 1
        %s294 = scalar_select %p293, %s25, 1
        %p295 = scmp.lt.s32.totalorder %s292, 7
        %s296 = scalar_select %p295, %s292, 7
        %s297 = smul.addr %s294, 8
        %s298 = sadd.s32 %s296, %s297
        %s299 = smul.addr %s298, 8
        %s300 = scalar_lea.vmem %s5, %s299
        %p301 = pneg %p204
        %p302 = pneg %p201
        %s303 = sand.u32 %s191, 1
        %s304 = scalar_lea.sflag [#allocation4], %s303
        %s305 = sand.u32 %s191, 1
        %s306 = smul.addr %s305, 8
        %s307 = scalar_lea.vmem [#allocation3], %s306
        %p308 = scmp.lt.s32.totalorder %s25, 1
        %s309 = scalar_select %p308, %s25, 1
        %s310 = smul.addr %s309, 8
        %s311 = scalar_lea.vmem %s0, %s310
        %p312 = scmp.lt.s32.totalorder %s25, 1
        %s313 = scalar_select %p312, %s25, 1
        %s314 = smul.addr %s313, 8
        %s315 = scalar_lea.vmem %s1, %s314
        %s316 = smul.u32 8, %s26
        %p317 = scmp.lt.s32.totalorder %s25, 1
        %s318 = scalar_select %p317, %s25, 1
        %p319 = scmp.lt.s32.totalorder %s316, 7
        %s320 = scalar_select %p319, %s316, 7
        %s321 = smul.addr %s318, 8
        %s322 = sadd.s32 %s320, %s321
        %s323 = smul.addr %s322, 8
        %s324 = scalar_lea.vmem %s2, %s323
        %s325 = smul.u32 8, %s26
        %s326 = smul.u32 8, %s26
        %p327 = scmp.lt.s32.totalorder %s25, 1
        %s328 = scalar_select %p327, %s25, 1
        %p329 = scmp.lt.s32.totalorder %s326, 7
        %s330 = scalar_select %p329, %s326, 7
        %s331 = smul.addr %s328, 8
        %s332 = sadd.s32 %s330, %s331
        %s333 = smul.addr %s332, 8
        %s334 = scalar_lea.vmem %s5, %s333
        %s335 = smul.u32 8, %s26
        %p336 = scmp.eq.s32.totalorder %s26, 0
        // Predicated region
        $region41: #{mimo_who_attention.1} parent=39 // pred_check
          %p337 = pneg %p336
        $region42: #{mimo_who_attention.1} parent=39 // pred_check_branch
          %339 = sbr.rel (%p337) target = $region44
        $region43: #{mimo_who_attention.1} parent=39 // pred_region
          %v340 = vld [vmem:[%s311] sm:$0xff]
          %v341 = vld [vmem:[%s3] sm:$0xff]
          %v342 = vld [vmem:[%s3 + $0x8] sm:$0xff]
          %v343 = vld [vmem:[%s3 + $0x10] sm:$0xff]
          %v344 = vld [vmem:[%s3 + $0x18] sm:$0xff]
          %v345 = vld [vmem:[%s4] sm:$0x1]
          %v347 = vlaneseq
          %v348 = vshrl.u32 %v347, 7
          %v349 = vsub.s32 0, %v348
          %v350 = vrot.slane %v345, %v349
          %vm352 = vcmask 261120
          %v354 = vsel %vm352, %v340, 0
          %356 = vmatprep.subr.mxu0 0.0
          %357 = vmatpush1.msra.mxu0 %v341
          %358 = vmatprep.subr.mxu0 0.0
          %359 = vmatpush1.msra.mxu0 %v342
          %360 = vmatprep.subr.mxu0 0.0
          %361 = vmatpush1.msra.mxu0 %v343
          %362 = vmatprep.subr.mxu0 0.0
          %363 = vmatpush1.msra.mxu0 %v344
          %364 = vmatprep.subr.mxu0 0.0
          %365 = vmatpush1.msra.mxu0 0.0
          %366 = vmatprep.subr.mxu0 0.0
          %367 = vmatpush1.msra.mxu0 0.0
          %368 = vmatprep.subr.mxu0 0.0
          %369 = vmatpush1.msra.mxu0 0.0
          %370 = vmatprep.subr.mxu0 0.0
          %371 = vmatpush1.msra.mxu0 0.0
          %372 = vmatprep.subr.mxu0 0.0
          %373 = vmatpush1.msra.mxu0 0.0
          %374 = vmatprep.subr.mxu0 0.0
          %375 = vmatpush1.msra.mxu0 0.0
          %376 = vmatprep.subr.mxu0 0.0
          %377 = vmatpush1.msra.mxu0 0.0
          %378 = vmatprep.subr.mxu0 0.0
          %379 = vmatpush1.msra.mxu0 0.0
          %380 = vmatprep.subr.mxu0 0.0
          %381 = vmatpush1.msra.mxu0 0.0
          %382 = vmatprep.subr.mxu0 0.0
          %383 = vmatpush1.msra.mxu0 0.0
          %384 = vmatprep.subr.mxu0 0.0
          %385 = vmatpush1.msra.mxu0 0.0
          %386 = vmatprep.subr.mxu0 0.0
          %387 = vmatpush1.msra.mxu0 0.0
          %388 = vmatprep.subr.mxu0 0.0
          %389 = vmatpush1.msra.mxu0 0.0
          %390 = vmatprep.subr.mxu0 0.0
          %391 = vmatpush1.msra.mxu0 0.0
          %392 = vmatprep.subr.mxu0 0.0
          %393 = vmatpush1.msra.mxu0 0.0
          %394 = vmatprep.subr.mxu0 0.0
          %395 = vmatpush1.msra.mxu0 0.0
          %396 = vmatprep.subr.mxu0 0.0
          %397 = vmatpush1.msra.mxu0 0.0
          %398 = vmatprep.subr.mxu0 0.0
          %399 = vmatpush1.msra.mxu0 0.0
          %400 = vmatprep.subr.mxu0 0.0
          %401 = vmatpush1.msra.mxu0 0.0
          %402 = vmatprep.subr.mxu0 0.0
          %403 = vmatpush1.msra.mxu0 0.0
          %404 = vmatprep.subr.mxu0 0.0
          %405 = vmatpush1.msra.mxu0 0.0
          %406 = vmatprep.subr.mxu0 0.0
          %407 = vmatpush1.msra.mxu0 0.0
          %408 = vmatprep.subr.mxu0 0.0
          %409 = vmatpush1.msra.mxu0 0.0
          %410 = vmatprep.subr.mxu0 0.0
          %411 = vmatpush1.msra.mxu0 0.0
          %412 = vmatprep.subr.mxu0 0.0
          %413 = vmatpush1.msra.mxu0 0.0
          %414 = vmatprep.subr.mxu0 0.0
          %415 = vmatpush1.msra.mxu0 0.0
          %416 = vmatprep.subr.mxu0 0.0
          %417 = vmatpush1.msra.mxu0 0.0
          %418 = vmatprep.subr.mxu0 0.0
          %419 = vmatpush1.msra.mxu0 0.0
          %420 = vmatprep.mubr.f32.mxu0 0.0
          %421 = vmatmul.mubr.f32.gmra.mrb[0].mxu0 %v354
          %v422 = vpop.f32.mrb[0].mxu0
          %v423 = vadd.f32 %v350, %v422
          %v424 = vpop.f32.mrb[0].mxu0
          %425 = vdwg.mxu0
          %v426 = vld [vmem:[%s315] sm:$0xff]
          %v428 = vsel %vm352, %v426, 0
          %v431 = vsel %vm352, %v423, 0
          %433 = vmatprep.subr.mxu0 0.0
          %434 = vmatpush1.xpose.msra.mxu0 %v431
          %435 = vmatprep.subr.mxu0 0.0
          %436 = vmatpush1.xpose.msra.mxu0 0.0
          %437 = vmatprep.subr.mxu0 0.0
          %438 = vmatpush1.xpose.msra.mxu0 0.0
          %439 = vmatprep.subr.mxu0 0.0
          %440 = vmatpush1.xpose.msra.mxu0 0.0
          %441 = vmatprep.subr.mxu0 0.0
          %442 = vmatpush1.xpose.msra.mxu0 0.0
          %443 = vmatprep.subr.mxu0 0.0
          %444 = vmatpush1.xpose.msra.mxu0 0.0
          %445 = vmatprep.subr.mxu0 0.0
          %446 = vmatpush1.xpose.msra.mxu0 0.0
          %447 = vmatprep.subr.mxu0 0.0
          %448 = vmatpush1.xpose.msra.mxu0 0.0
          %449 = vmatprep.subr.mxu0 0.0
          %450 = vmatpush1.xpose.msra.mxu0 0.0
          %451 = vmatprep.subr.mxu0 0.0
          %452 = vmatpush1.xpose.msra.mxu0 0.0
          %453 = vmatprep.subr.mxu0 0.0
          %454 = vmatpush1.xpose.msra.mxu0 0.0
          %455 = vmatprep.subr.mxu0 0.0
          %456 = vmatpush1.xpose.msra.mxu0 0.0
          %457 = vmatprep.subr.mxu0 0.0
          %458 = vmatpush1.xpose.msra.mxu0 0.0
          %459 = vmatprep.subr.mxu0 0.0
          %460 = vmatpush1.xpose.msra.mxu0 0.0
          %461 = vmatprep.subr.mxu0 0.0
          %462 = vmatpush1.xpose.msra.mxu0 0.0
          %463 = vmatprep.subr.mxu0 0.0
          %464 = vmatpush1.xpose.msra.mxu0 0.0
          %465 = vmatprep.subr.mxu0 0.0
          %466 = vmatpush1.xpose.msra.mxu0 0.0
          %467 = vmatprep.subr.mxu0 0.0
          %468 = vmatpush1.xpose.msra.mxu0 0.0
          %469 = vmatprep.subr.mxu0 0.0
          %470 = vmatpush1.xpose.msra.mxu0 0.0
          %471 = vmatprep.subr.mxu0 0.0
          %472 = vmatpush1.xpose.msra.mxu0 0.0
          %473 = vmatprep.subr.mxu0 0.0
          %474 = vmatpush1.xpose.msra.mxu0 0.0
          %475 = vmatprep.subr.mxu0 0.0
          %476 = vmatpush1.xpose.msra.mxu0 0.0
          %477 = vmatprep.subr.mxu0 0.0
          %478 = vmatpush1.xpose.msra.mxu0 0.0
          %479 = vmatprep.subr.mxu0 0.0
          %480 = vmatpush1.xpose.msra.mxu0 0.0
          %481 = vmatprep.subr.mxu0 0.0
          %482 = vmatpush1.xpose.msra.mxu0 0.0
          %483 = vmatprep.subr.mxu0 0.0
          %484 = vmatpush1.xpose.msra.mxu0 0.0
          %485 = vmatprep.subr.mxu0 0.0
          %486 = vmatpush1.xpose.msra.mxu0 0.0
          %487 = vmatprep.subr.mxu0 0.0
          %488 = vmatpush1.xpose.msra.mxu0 0.0
          %489 = vmatprep.subr.mxu0 0.0
          %490 = vmatpush1.xpose.msra.mxu0 0.0
          %491 = vmatprep.subr.mxu0 0.0
          %492 = vmatpush1.xpose.msra.mxu0 0.0
          %493 = vmatprep.subr.mxu0 0.0
          %494 = vmatpush1.xpose.msra.mxu0 0.0
          %495 = vmatprep.subr.mxu0 0.0
          %496 = vmatpush1.xpose.msra.mxu0 0.0
          %497 = vmatprep.mubr.f32.mxu0 0.0
          %498 = vmatmul.mubr.f32.gmra.mrb[0].mxu0 %v428
          %v499 = vpop.f32.mrb[0].mxu0
          %v500 = vadd.f32 0.0, %v499
          %v501 = vpop.f32.mrb[0].mxu0
          %502 = vdwg.mxu0
          %v503 = vlaneseq
          %v504 = vshrl.u32 %v503, 7
          %v505 = vlaneseq
          %v506 = vand.u32 %v505, 127
          %vm507 = vcmp.eq.s32.totalorder %v504, %v506
          %v508 = vsel %vm507, -inf, %v500
          %vm509 = vcmask 64512
          %v510 = vsel %vm509, %v508, -inf
          %v511 = vrot.slane %v510, 4
          %v512 = vmax.f32 %v510, %v511
          %v513 = vrot.slane %v512, 2
          %v514 = vmax.f32 %v512, %v513
          %v515 = vrot.slane %v514, 1
          %v516 = vmax.f32 %v514, %v515
          %v517 = vsub.f32 %v508, %v516
          %v518 = vmul.f32 %v517, 1.442695
          %v519 = vpow.pop %v518
          %v520 = vsel %vm509, %v519, 0.0
          %v521 = vrot.slane %v520, 4
          %v522 = vadd.f32 %v520, %v521
          %v523 = vrot.slane %v522, 2
          %v524 = vadd.f32 %v522, %v523
          %v525 = vrot.slane %v524, 1
          %v526 = vadd.f32 %v524, %v525
          %v527 = vrcp.pop %v526
          %v528 = vmul.f32 %v519, %v527
          %529 = vst.msk [vmem:[#allocation2] sm:$0xff] %vm509, %v528
        $region44: #{mimo_who_attention.1} parent=39 // pred_fallthru
          _
        %v530 = vld [vmem:[#allocation2] sm:$0xff]
        %v531 = vld [vmem:[%s324] sm:$0xff]
        %v532 = vld [vmem:[%s324 + $0x8] sm:$0xff]
        %v533 = vld [vmem:[%s324 + $0x10] sm:$0xff]
        %v534 = vld [vmem:[%s324 + $0x18] sm:$0xff]
        %v535 = vld [vmem:[%s324 + $0x20] sm:$0xff]
        %v536 = vld [vmem:[%s324 + $0x28] sm:$0xff]
        %v537 = vld [vmem:[%s324 + $0x30] sm:$0xff]
        %v538 = vld [vmem:[%s324 + $0x38] sm:$0xff]
        %539 = vxpose.xlu0.b32.start [1/16] %v530, 128
        %540 = vxpose.xlu0.b32.cont [2/16] 0.0, 128
        %541 = vxpose.xlu0.b32.cont [3/16] 0.0, 128
        %542 = vxpose.xlu0.b32.cont [4/16] 0.0, 128
        %543 = vxpose.xlu0.b32.cont [5/16] 0.0, 128
        %544 = vxpose.xlu0.b32.cont [6/16] 0.0, 128
        %545 = vxpose.xlu0.b32.cont [7/16] 0.0, 128
        %546 = vxpose.xlu0.b32.cont [8/16] 0.0, 128
        %547 = vxpose.xlu0.b32.cont [9/16] 0.0, 128
        %548 = vxpose.xlu0.b32.cont [10/16] 0.0, 128
        %549 = vxpose.xlu0.b32.cont [11/16] 0.0, 128
        %550 = vxpose.xlu0.b32.cont [12/16] 0.0, 128
        %551 = vxpose.xlu0.b32.cont [13/16] 0.0, 128
        %552 = vxpose.xlu0.b32.cont [14/16] 0.0, 128
        %553 = vxpose.xlu0.b32.cont [15/16] 0.0, 128
        %554 = vxpose.xlu0.b32.end [16/16] 0.0, 128
        %v555 = vpop.trf.xlu0
        %v556 = vpop.trf.xlu0
        %v557 = vpop.trf.xlu0
        %v558 = vpop.trf.xlu0
        %v559 = vpop.trf.xlu0
        %v560 = vpop.trf.xlu0
        %v561 = vpop.trf.xlu0
        %v562 = vpop.trf.xlu0
        %v563 = vpop.trf.xlu0
        %v564 = vpop.trf.xlu0
        %v565 = vpop.trf.xlu0
        %v566 = vpop.trf.xlu0
        %v567 = vpop.trf.xlu0
        %v568 = vpop.trf.xlu0
        %v569 = vpop.trf.xlu0
        %v570 = vpop.trf.xlu0
        %vm571 = vcmask 64512
        %v573 = vsel %vm571, %v555, 0
        %575 = vmatprep.subr.mxu0 %v532
        %576 = vmatpush1.msra.mxu0 %v531
        %577 = vmatprep.subr.mxu0 0.0
        %578 = vmatpush1.msra.mxu0 0.0
        %579 = vmatprep.subr.mxu0 0.0
        %580 = vmatpush1.msra.mxu0 0.0
        %581 = vmatprep.subr.mxu0 0.0
        %582 = vmatpush1.msra.mxu0 0.0
        %583 = vmatprep.subr.mxu0 0.0
        %584 = vmatpush1.msra.mxu0 0.0
        %585 = vmatprep.subr.mxu0 0.0
        %586 = vmatpush1.msra.mxu0 0.0
        %587 = vmatprep.subr.mxu0 0.0
        %588 = vmatpush1.msra.mxu0 0.0
        %589 = vmatprep.subr.mxu0 0.0
        %590 = vmatpush1.msra.mxu0 0.0
        %591 = vmatprep.subr.mxu0 0.0
        %592 = vmatpush1.msra.mxu0 0.0
        %593 = vmatprep.subr.mxu0 0.0
        %594 = vmatpush1.msra.mxu0 0.0
        %595 = vmatprep.subr.mxu0 0.0
        %596 = vmatpush1.msra.mxu0 0.0
        %597 = vmatprep.subr.mxu0 0.0
        %598 = vmatpush1.msra.mxu0 0.0
        %599 = vmatprep.subr.mxu0 0.0
        %600 = vmatpush1.msra.mxu0 0.0
        %601 = vmatprep.subr.mxu0 0.0
        %602 = vmatpush1.msra.mxu0 0.0
        %603 = vmatprep.subr.mxu0 0.0
        %604 = vmatpush1.msra.mxu0 0.0
        %605 = vmatprep.subr.mxu0 0.0
        %606 = vmatpush1.msra.mxu0 0.0
        %607 = vmatprep.subr.mxu0 0.0
        %608 = vmatpush1.msra.mxu0 0.0
        %609 = vmatprep.subr.mxu0 0.0
        %610 = vmatpush1.msra.mxu0 0.0
        %611 = vmatprep.subr.mxu0 0.0
        %612 = vmatpush1.msra.mxu0 0.0
        %613 = vmatprep.subr.mxu0 0.0
        %614 = vmatpush1.msra.mxu0 0.0
        %615 = vmatprep.subr.mxu0 0.0
        %616 = vmatpush1.msra.mxu0 0.0
        %617 = vmatprep.subr.mxu0 0.0
        %618 = vmatpush1.msra.mxu0 0.0
        %619 = vmatprep.subr.mxu0 0.0
        %620 = vmatpush1.msra.mxu0 0.0
        %621 = vmatprep.subr.mxu0 0.0
        %622 = vmatpush1.msra.mxu0 0.0
        %623 = vmatprep.subr.mxu0 0.0
        %624 = vmatpush1.msra.mxu0 0.0
        %625 = vmatprep.subr.mxu0 0.0
        %626 = vmatpush1.msra.mxu0 0.0
        %627 = vmatprep.subr.mxu0 0.0
        %628 = vmatpush1.msra.mxu0 0.0
        %629 = vmatprep.subr.mxu0 0.0
        %630 = vmatpush1.msra.mxu0 0.0
        %631 = vmatprep.subr.mxu0 0.0
        %632 = vmatpush1.msra.mxu0 0.0
        %633 = vmatprep.subr.mxu0 0.0
        %634 = vmatpush1.msra.mxu0 0.0
        %635 = vmatprep.subr.mxu0 0.0
        %636 = vmatpush1.msra.mxu0 0.0
        %637 = vmatprep.subr.mxu0 0.0
        %638 = vmatpush1.msra.mxu0 0.0
        %639 = vmatprep.mubr.f32.mxu0 0.0
        %640 = vmatmul.mubr.f32.gmra.mrb[0].mxu0 %v573
        %v641 = vpop.f32.mrb[0].mxu0
        %v642 = vadd.f32 0.0, %v641
        %v643 = vpop.f32.mrb[0].mxu0
        %v644 = vadd.f32 0.0, %v643
        %645 = vdwg.mxu0
        %646 = vmatprep.subr.mxu0 %v534
        %647 = vmatpush1.msra.mxu0 %v533
        %648 = vmatprep.subr.mxu0 0.0
        %649 = vmatpush1.msra.mxu0 0.0
        %650 = vmatprep.subr.mxu0 0.0
        %651 = vmatpush1.msra.mxu0 0.0
        %652 = vmatprep.subr.mxu0 0.0
        %653 = vmatpush1.msra.mxu0 0.0
        %654 = vmatprep.subr.mxu0 0.0
        %655 = vmatpush1.msra.mxu0 0.0
        %656 = vmatprep.subr.mxu0 0.0
        %657 = vmatpush1.msra.mxu0 0.0
        %658 = vmatprep.subr.mxu0 0.0
        %659 = vmatpush1.msra.mxu0 0.0
        %660 = vmatprep.subr.mxu0 0.0
        %661 = vmatpush1.msra.mxu0 0.0
        %662 = vmatprep.subr.mxu0 0.0
        %663 = vmatpush1.msra.mxu0 0.0
        %664 = vmatprep.subr.mxu0 0.0
        %665 = vmatpush1.msra.mxu0 0.0
        %666 = vmatprep.subr.mxu0 0.0
        %667 = vmatpush1.msra.mxu0 0.0
        %668 = vmatprep.subr.mxu0 0.0
        %669 = vmatpush1.msra.mxu0 0.0
        %670 = vmatprep.subr.mxu0 0.0
        %671 = vmatpush1.msra.mxu0 0.0
        %672 = vmatprep.subr.mxu0 0.0
        %673 = vmatpush1.msra.mxu0 0.0
        %674 = vmatprep.subr.mxu0 0.0
        %675 = vmatpush1.msra.mxu0 0.0
        %676 = vmatprep.subr.mxu0 0.0
        %677 = vmatpush1.msra.mxu0 0.0
        %678 = vmatprep.subr.mxu0 0.0
        %679 = vmatpush1.msra.mxu0 0.0
        %680 = vmatprep.subr.mxu0 0.0
        %681 = vmatpush1.msra.mxu0 0.0
        %682 = vmatprep.subr.mxu0 0.0
        %683 = vmatpush1.msra.mxu0 0.0
        %684 = vmatprep.subr.mxu0 0.0
        %685 = vmatpush1.msra.mxu0 0.0
        %686 = vmatprep.subr.mxu0 0.0
        %687 = vmatpush1.msra.mxu0 0.0
        %688 = vmatprep.subr.mxu0 0.0
        %689 = vmatpush1.msra.mxu0 0.0
        %690 = vmatprep.subr.mxu0 0.0
        %691 = vmatpush1.msra.mxu0 0.0
        %692 = vmatprep.subr.mxu0 0.0
        %693 = vmatpush1.msra.mxu0 0.0
        %694 = vmatprep.subr.mxu0 0.0
        %695 = vmatpush1.msra.mxu0 0.0
        %696 = vmatprep.subr.mxu0 0.0
        %697 = vmatpush1.msra.mxu0 0.0
        %698 = vmatprep.subr.mxu0 0.0
        %699 = vmatpush1.msra.mxu0 0.0
        %700 = vmatprep.subr.mxu0 0.0
        %701 = vmatpush1.msra.mxu0 0.0
        %702 = vmatprep.subr.mxu0 0.0
        %703 = vmatpush1.msra.mxu0 0.0
        %704 = vmatprep.subr.mxu0 0.0
        %705 = vmatpush1.msra.mxu0 0.0
        %706 = vmatprep.subr.mxu0 0.0
        %707 = vmatpush1.msra.mxu0 0.0
        %708 = vmatprep.subr.mxu0 0.0
        %709 = vmatpush1.msra.mxu0 0.0
        %710 = vmatprep.mubr.f32.mxu0 0.0
        %711 = vmatmul.mubr.f32.gmra.mrb[0].mxu0 %v573
        %v712 = vpop.f32.mrb[0].mxu0
        %v713 = vadd.f32 0.0, %v712
        %v714 = vpop.f32.mrb[0].mxu0
        %v715 = vadd.f32 0.0, %v714
        %716 = vdwg.mxu0
        %717 = vmatprep.subr.mxu0 %v536
        %718 = vmatpush1.msra.mxu0 %v535
        %719 = vmatprep.subr.mxu0 0.0
        %720 = vmatpush1.msra.mxu0 0.0
        %721 = vmatprep.subr.mxu0 0.0
        %722 = vmatpush1.msra.mxu0 0.0
        %723 = vmatprep.subr.mxu0 0.0
        %724 = vmatpush1.msra.mxu0 0.0
        %725 = vmatprep.subr.mxu0 0.0
        %726 = vmatpush1.msra.mxu0 0.0
        %727 = vmatprep.subr.mxu0 0.0
        %728 = vmatpush1.msra.mxu0 0.0
        %729 = vmatprep.subr.mxu0 0.0
        %730 = vmatpush1.msra.mxu0 0.0
        %731 = vmatprep.subr.mxu0 0.0
        %732 = vmatpush1.msra.mxu0 0.0
        %733 = vmatprep.subr.mxu0 0.0
        %734 = vmatpush1.msra.mxu0 0.0
        %735 = vmatprep.subr.mxu0 0.0
        %736 = vmatpush1.msra.mxu0 0.0
        %737 = vmatprep.subr.mxu0 0.0
        %738 = vmatpush1.msra.mxu0 0.0
        %739 = vmatprep.subr.mxu0 0.0
        %740 = vmatpush1.msra.mxu0 0.0
        %741 = vmatprep.subr.mxu0 0.0
        %742 = vmatpush1.msra.mxu0 0.0
        %743 = vmatprep.subr.mxu0 0.0
        %744 = vmatpush1.msra.mxu0 0.0
        %745 = vmatprep.subr.mxu0 0.0
        %746 = vmatpush1.msra.mxu0 0.0
        %747 = vmatprep.subr.mxu0 0.0
        %748 = vmatpush1.msra.mxu0 0.0
        %749 = vmatprep.subr.mxu0 0.0
        %750 = vmatpush1.msra.mxu0 0.0
        %751 = vmatprep.subr.mxu0 0.0
        %752 = vmatpush1.msra.mxu0 0.0
        %753 = vmatprep.subr.mxu0 0.0
        %754 = vmatpush1.msra.mxu0 0.0
        %755 = vmatprep.subr.mxu0 0.0
        %756 = vmatpush1.msra.mxu0 0.0
        %757 = vmatprep.subr.mxu0 0.0
        %758 = vmatpush1.msra.mxu0 0.0
        %759 = vmatprep.subr.mxu0 0.0
        %760 = vmatpush1.msra.mxu0 0.0
        %761 = vmatprep.subr.mxu0 0.0
        %762 = vmatpush1.msra.mxu0 0.0
        %763 = vmatprep.subr.mxu0 0.0
        %764 = vmatpush1.msra.mxu0 0.0
        %765 = vmatprep.subr.mxu0 0.0
        %766 = vmatpush1.msra.mxu0 0.0
        %767 = vmatprep.subr.mxu0 0.0
        %768 = vmatpush1.msra.mxu0 0.0
        %769 = vmatprep.subr.mxu0 0.0
        %770 = vmatpush1.msra.mxu0 0.0
        %771 = vmatprep.subr.mxu0 0.0
        %772 = vmatpush1.msra.mxu0 0.0
        %773 = vmatprep.subr.mxu0 0.0
        %774 = vmatpush1.msra.mxu0 0.0
        %775 = vmatprep.subr.mxu0 0.0
        %776 = vmatpush1.msra.mxu0 0.0
        %777 = vmatprep.subr.mxu0 0.0
        %778 = vmatpush1.msra.mxu0 0.0
        %779 = vmatprep.subr.mxu0 0.0
        %780 = vmatpush1.msra.mxu0 0.0
        %781 = vmatprep.mubr.f32.mxu0 0.0
        %782 = vmatmul.mubr.f32.gmra.mrb[0].mxu0 %v573
        %v783 = vpop.f32.mrb[0].mxu0
        %v784 = vadd.f32 0.0, %v783
        %v785 = vpop.f32.mrb[0].mxu0
        %v786 = vadd.f32 0.0, %v785
        %787 = vdwg.mxu0
        %788 = vmatprep.subr.mxu0 %v538
        %789 = vmatpush1.msra.mxu0 %v537
        %790 = vmatprep.subr.mxu0 0.0
        %791 = vmatpush1.msra.mxu0 0.0
        %792 = vmatprep.subr.mxu0 0.0
        %793 = vmatpush1.msra.mxu0 0.0
        %794 = vmatprep.subr.mxu0 0.0
        %795 = vmatpush1.msra.mxu0 0.0
        %796 = vmatprep.subr.mxu0 0.0
        %797 = vmatpush1.msra.mxu0 0.0
        %798 = vmatprep.subr.mxu0 0.0
        %799 = vmatpush1.msra.mxu0 0.0
        %800 = vmatprep.subr.mxu0 0.0
        %801 = vmatpush1.msra.mxu0 0.0
        %802 = vmatprep.subr.mxu0 0.0
        %803 = vmatpush1.msra.mxu0 0.0
        %804 = vmatprep.subr.mxu0 0.0
        %805 = vmatpush1.msra.mxu0 0.0
        %806 = vmatprep.subr.mxu0 0.0
        %807 = vmatpush1.msra.mxu0 0.0
        %808 = vmatprep.subr.mxu0 0.0
        %809 = vmatpush1.msra.mxu0 0.0
        %810 = vmatprep.subr.mxu0 0.0
        %811 = vmatpush1.msra.mxu0 0.0
        %812 = vmatprep.subr.mxu0 0.0
        %813 = vmatpush1.msra.mxu0 0.0
        %814 = vmatprep.subr.mxu0 0.0
        %815 = vmatpush1.msra.mxu0 0.0
        %816 = vmatprep.subr.mxu0 0.0
        %817 = vmatpush1.msra.mxu0 0.0
        %818 = vmatprep.subr.mxu0 0.0
        %819 = vmatpush1.msra.mxu0 0.0
        %820 = vmatprep.subr.mxu0 0.0
        %821 = vmatpush1.msra.mxu0 0.0
        %822 = vmatprep.subr.mxu0 0.0
        %823 = vmatpush1.msra.mxu0 0.0
        %824 = vmatprep.subr.mxu0 0.0
        %825 = vmatpush1.msra.mxu0 0.0
        %826 = vmatprep.subr.mxu0 0.0
        %827 = vmatpush1.msra.mxu0 0.0
        %828 = vmatprep.subr.mxu0 0.0
        %829 = vmatpush1.msra.mxu0 0.0
        %830 = vmatprep.subr.mxu0 0.0
        %831 = vmatpush1.msra.mxu0 0.0
        %832 = vmatprep.subr.mxu0 0.0
        %833 = vmatpush1.msra.mxu0 0.0
        %834 = vmatprep.subr.mxu0 0.0
        %835 = vmatpush1.msra.mxu0 0.0
        %836 = vmatprep.subr.mxu0 0.0
        %837 = vmatpush1.msra.mxu0 0.0
        %838 = vmatprep.subr.mxu0 0.0
        %839 = vmatpush1.msra.mxu0 0.0
        %840 = vmatprep.subr.mxu0 0.0
        %841 = vmatpush1.msra.mxu0 0.0
        %842 = vmatprep.subr.mxu0 0.0
        %843 = vmatpush1.msra.mxu0 0.0
        %844 = vmatprep.subr.mxu0 0.0
        %845 = vmatpush1.msra.mxu0 0.0
        %846 = vmatprep.subr.mxu0 0.0
        %847 = vmatpush1.msra.mxu0 0.0
        %848 = vmatprep.subr.mxu0 0.0
        %849 = vmatpush1.msra.mxu0 0.0
        %850 = vmatprep.subr.mxu0 0.0
        %851 = vmatpush1.msra.mxu0 0.0
        %852 = vmatprep.mubr.f32.mxu0 0.0
        %853 = vmatmul.mubr.f32.gmra.mrb[0].mxu0 %v573
        %v854 = vpop.f32.mrb[0].mxu0
        %v855 = vadd.f32 0.0, %v854
        %v856 = vpop.f32.mrb[0].mxu0
        %v857 = vadd.f32 0.0, %v856
        %858 = vdwg.mxu0
        %859 = vst [vmem:[%s334] sm:$0xff] %v642
        %860 = vst [vmem:[%s334 + $0x8] sm:$0xff] %v644
        %861 = vst [vmem:[%s334 + $0x10] sm:$0xff] %v713
        %862 = vst [vmem:[%s334 + $0x18] sm:$0xff] %v715
        %863 = vst [vmem:[%s334 + $0x20] sm:$0xff] %v784
        %864 = vst [vmem:[%s334 + $0x28] sm:$0xff] %v786
        %865 = vst [vmem:[%s334 + $0x30] sm:$0xff] %v855
        %866 = vst [vmem:[%s334 + $0x38] sm:$0xff] %v857
        %867 = vst.msk [vmem:[%s307] sm:$0xff] %vm571, %v530
        %s868 = smul.u32 8, %s26
        %p869 = scmp.lt.s32.totalorder %s25, 1
        %s870 = scalar_select %p869, %s25, 1
        %p871 = scmp.lt.s32.totalorder %s868, 7
        %s872 = scalar_select %p871, %s868, 7
        %s873 = smul.addr %s870, 8
        %s874 = sadd.s32 %s872, %s873
        %s875 = smul.addr %s874, 8
        %s876 = scalar_lea.vmem %s5, %s875
        %s877 = sand.u32 %s191, 1
        %s878 = scalar_lea.sflag [#allocation4], %s877
        %s879 = sand.u32 %s191, 1
        %s880 = smul.addr %s879, 8
        %s881 = scalar_lea.vmem [#allocation3], %s880
        // Predicated region
        $region45: #{mimo_who_attention.1} parent=39 // pred_check
          %p882 = pneg %p175
        $region46: #{mimo_who_attention.1} parent=39 // pred_check_branch
          %884 = sbr.rel (%p882) target = $region48
        $region47: #{mimo_who_attention.1} parent=39 // pred_region
          %s885 = smul.u32 8, %s26
        $region48: #{mimo_who_attention.1} parent=39 // pred_fallthru
          _
        // Predicated region
        $region49: #{mimo_who_attention.1} parent=39 // pred_check
          %p886 = pneg %p201
        $region50: #{mimo_who_attention.1} parent=39 // pred_check_branch
          %888 = sbr.rel (%p886) target = $region52
        $region51: #{mimo_who_attention.1} parent=39 // pred_region
          %s890 = ssub.s32 128, 128
          %891 = vsyncadd %s878, %s890
          %s892 = smul.addr %s25, 128
          %s893 = scalar_lea.hbm %s6, %s892
          %s895 = sshll.u32 %s881, 4
          %s896 = int_to_ptr.vmem [resolvable:$true] %s895
          %898 = dma.vmem_to_hbm [thread:$0]  %s896, 128, %s893, %s878
        $region52: #{mimo_who_attention.1} parent=39 // pred_fallthru
          _
      $region40: #{mimo_who_attention.1} parent=5 // pred_fallthru
        _
      %p899 = scmp.le.s32.totalorder 2, %s16
      // Predicated region
      $region53: #{mimo_who_attention.1} parent=5 // pred_check
        %p900 = pneg %p899
      $region54: #{mimo_who_attention.1} parent=5 // pred_check_branch
        %902 = sbr.rel (%p900) target = $region56
      $region55: #{mimo_who_attention.1} parent=5 // pred_region
        %s903 = ssub.s32 %s16, 2
        // Predicated region
        $region57: #{mimo_who_attention.1} parent=55 // pred_check
          %p904 = pneg %p181
        $region58: #{mimo_who_attention.1} parent=55 // pred_check_branch
          %906 = sbr.rel (%p904) target = $region60
        $region59: #{mimo_who_attention.1} parent=55 // pred_region
          %s907 = smul.u32 8, %s28
          %p908 = scmp.lt.s32.totalorder %s27, 1
          %s909 = scalar_select %p908, %s27, 1
          %p910 = scmp.lt.s32.totalorder %s907, 7
          %s911 = scalar_select %p910, %s907, 7
          %s912 = smul.addr %s909, 8
          %s913 = sadd.s32 %s911, %s912
          %s914 = smul.addr %s913, 8
          %s915 = scalar_lea.vmem %s5, %s914
        $region60: #{mimo_who_attention.1} parent=55 // pred_fallthru
          _
        // Predicated region
        $region61: #{mimo_who_attention.1} parent=55 // pred_check
          %p916 = pneg %p207
        $region62: #{mimo_who_attention.1} parent=55 // pred_check_branch
          %918 = sbr.rel (%p916) target = $region64
        $region63: #{mimo_who_attention.1} parent=55 // pred_region
          %s919 = sand.u32 %s192, 1
          %s920 = scalar_lea.sflag [#allocation4], %s919
          %s921 = sand.u32 %s192, 1
          %s922 = smul.addr %s921, 8
          %s923 = scalar_lea.vmem [#allocation3], %s922
          %924 = dma.done %s920, 128
        $region64: #{mimo_who_attention.1} parent=55 // pred_fallthru
          _
      $region56: #{mimo_who_attention.1} parent=5 // pred_fallthru
        _
    $region6: #{mimo_who_attention.1} parent=1 // loop_footer
      %s20 = sadd.s32 1, %s16
    $region7: #{mimo_who_attention.1} parent=1 // loop_footer_branch
      %15 = sbr.rel target = $region3
    $region8: #{mimo_who_attention.1} parent=1 // loop_exit
      _
    %925 = vsyncpa [#allocation4], 1
    %s926 = scalar_lea.sflag [#allocation4], 1
    %927 = vsyncpa %s926, 1

</llo_original>
